<compile_context>
chip_gen: v5e
topology: v5e:2x2
jax: 0.10.0
libtpu: 0.0.40
codegen_flags: <defaults>
</compile_context>

<pallas_src>
import jax
import jax.numpy as jnp
from jax.experimental import pallas as pl
from jax.experimental.pallas import tpu as pltpu


def _proj_kernel(pooled_ref, w_ref, b_ref, out_ref):
    # pooled_ref: (TB, P)  mean-pooled patch vector per batch row
    # w_ref:      (P, D)   full projection weight (fetched once)
    # b_ref:      (1, D)   projection bias
    # out_ref:    (TB, D)  pooled representation tile
    acc = jnp.dot(pooled_ref[...], w_ref[...], preferred_element_type=jnp.float32)
    out_ref[...] = (acc + b_ref[...].astype(jnp.float32)).astype(out_ref.dtype)


def _lane_dense_patch_mean(images, patch_size):
    """Mean over the patch grid, computed with lane-dense reduces.

    Returns (B, C*ph*pw) in f32 accumulation, element order (c, ph, pw) —
    matching the 'b (h w) (c ph pw)' rearrange of the reference module."""
    B, C, H, W = images.shape
    ph = pw = patch_size
    nh, nw = H // ph, W // pw
    x = images.astype(jnp.float32)  # convert fuses into the reduce; HBM read stays native-width
    # Stage 1: big-tensor reduce with the full width W kept in the lane dim.
    s1 = x.reshape(B, C, nh, ph, W).sum(axis=2)        # (B, C, ph, W)
    # Stage 2: tiny-tensor reduce over the patch-grid columns.
    s2 = s1.reshape(B, C, ph, nw, pw).sum(axis=3)      # (B, C, ph, pw)
    pooled = s2 * (1.0 / (nh * nw))
    return pooled.reshape(B, C * ph * pw)


def architecture_forward(images, weight, bias, patch_size):
    """images: (B, C, H, W); weight: (P, D) = (C*ps*ps, embed_dim); bias: (D,)."""
    B, C, H, W = images.shape
    P = C * patch_size * patch_size
    D = weight.shape[1]
    assert weight.shape == (P, D)

    compute_dtype = jnp.result_type(images.dtype, weight.dtype)
    pooled = _lane_dense_patch_mean(images, patch_size).astype(compute_dtype)
    bias2d = bias.reshape(1, D)

    # Batch tiling: whole batch when small; 256-row tiles otherwise.
    TB = B if B <= 256 else 256
    grid = (pl.cdiv(B, TB),)

    itemsize = jnp.dtype(compute_dtype).itemsize
    tile_bytes = (TB * P + P * D + D + TB * D) * itemsize
    # ~double-buffered footprint with headroom; >= v6e/v7x default, <= v7x physical.
    vmem_limit = int(min(64 << 20, max(32 << 20, 3 * tile_bytes)))

    out = pl.pallas_call(
        _proj_kernel,
        out_shape=jax.ShapeDtypeStruct((B, D), compute_dtype),
        grid=grid,
        in_specs=[
            pl.BlockSpec((TB, P), lambda i: (i, 0)),   # batch tile of pooled vectors
            pl.BlockSpec((P, D), lambda i: (0, 0)),    # full weight, constant index -> one DMA
            pl.BlockSpec((1, D), lambda i: (0, 0)),    # bias
        ],
        out_specs=pl.BlockSpec((TB, D), lambda i: (i, 0)),
        compiler_params=pltpu.CompilerParams(
            dimension_semantics=("parallel",),
            vmem_limit_bytes=vmem_limit,
        ),
    )(pooled, weight, bias2d)
    return out


def reference_forward(images, weight, bias, patch_size):
    """Direct translation of the PyTorch module: rearrange -> linear -> mean."""
    B, C, H, W = images.shape
    ph = pw = patch_size
    nh, nw = H // ph, W // pw
    patches = images.reshape(B, C, nh, ph, nw, pw)
    patches = jnp.transpose(patches, (0, 2, 4, 1, 3, 5)).reshape(B, nh * nw, C * ph * pw)
    proj = patches @ weight + bias  # (B, N, D)
    return jnp.mean(proj, axis=1)   # (B, D)


if __name__ == "__main__":
    # Small shapes consistent with the module:
    #   patch_size=16, channels=3, embed_dim=128, 32x32 images -> 4 patches.
    B, C, H, W = 2, 3, 32, 32
    patch_size = 16
    embed_dim = 128
    patch_dim = C * patch_size * patch_size  # 768

    key = jax.random.PRNGKey(0)
    k_img, k_w, k_b = jax.random.split(key, 3)
    images = jax.random.normal(k_img, (B, C, H, W), dtype=jnp.float32)
    # deterministic synthetic nn.Linear params (in=patch_dim, out=embed_dim)
    weight = jax.random.normal(k_w, (patch_dim, embed_dim), dtype=jnp.float32) * 0.02
    bias = jax.random.normal(k_b, (embed_dim,), dtype=jnp.float32) * 0.02

    out = jax.block_until_ready(architecture_forward(images, weight, bias, patch_size))
    ref = reference_forward(images, weight, bias, patch_size)

    assert out.shape == (B, embed_dim)
    assert jnp.allclose(out, ref, atol=1e-4, rtol=1e-4)

    print("KERNEL_OK")
</pallas_src>

<mosaic_0001>
module attributes {stable_mosaic.version = 11 : i64} {
  func.func @_proj_kernel(%arg0: i32, %arg1: memref<2x768xf32, #tpu.memory_space<vmem>>, %arg2: memref<768x128xf32, #tpu.memory_space<vmem>>, %arg3: memref<1x128xf32, #tpu.memory_space<vmem>>, %arg4: memref<2x128xf32, #tpu.memory_space<vmem>>) attributes {dimension_semantics = [#tpu.dimension_semantics<parallel>], iteration_bounds = array<i64: 1>, scalar_prefetch = 0 : i64, scratch_operands = 0 : i64, tpu.core_type = #tpu.core_type<tc>, window_params = [{transform_indices = @transform_0, window_bounds = array<i64: 2, 768>}, {pipeline_mode = #tpu.pipeline_mode<synchronous>, transform_indices = @transform_1, window_bounds = array<i64: 768, 128>}, {pipeline_mode = #tpu.pipeline_mode<synchronous>, transform_indices = @transform_2, window_bounds = array<i64: 1, 128>}, {transform_indices = @transform_3, window_bounds = array<i64: 2, 128>}]} {
    %c0 = arith.constant 0 : index
    %c0_0 = arith.constant 0 : index
    %0 = vector.load %arg1[%c0, %c0_0] : memref<2x768xf32, #tpu.memory_space<vmem>>, vector<2x768xf32>
    %c0_1 = arith.constant 0 : index
    %c0_2 = arith.constant 0 : index
    %1 = vector.load %arg2[%c0_1, %c0_2] : memref<768x128xf32, #tpu.memory_space<vmem>>, vector<768x128xf32>
    %cst = arith.constant dense<0.000000e+00> : vector<2x128xf32>
    %2 = tpu.matmul %0, %1, %cst {dimension_numbers = #tpu.dot_dimension_numbers<[1], [0], [0], [1], [0, 0, 1, 1], [], []>} : vector<2x768xf32>, vector<768x128xf32>, vector<2x128xf32> -> vector<2x128xf32>
    %c0_3 = arith.constant 0 : index
    %c0_4 = arith.constant 0 : index
    %3 = vector.load %arg3[%c0_3, %c0_4] : memref<1x128xf32, #tpu.memory_space<vmem>>, vector<1x128xf32>
    %4 = vector.broadcast %3 : vector<1x128xf32> to vector<2x128xf32>
    %5 = arith.addf %2, %4 : vector<2x128xf32>
    %c0_5 = arith.constant 0 : index
    %c0_6 = arith.constant 0 : index
    %6 = vector.load %arg4[%c0_5, %c0_6] : memref<2x128xf32, #tpu.memory_space<vmem>>, vector<2x128xf32>
    tpu.vector_store %arg4[%c0_5, %c0_6], %5 {strides = array<i32>} : memref<2x128xf32, #tpu.memory_space<vmem>>, vector<2x128xf32>,
    return
  }
  func.func @transform_0(%arg0: i32) -> (i32, i32) {
    %c0_i32 = arith.constant 0 : i32
    %c0_i32_0 = arith.constant 0 : i32
    return %arg0, %c0_i32 : i32, i32
  }
  func.func @transform_1(%arg0: i32) -> (i32, i32) {
    %c0_i32 = arith.constant 0 : i32
    %c0_i32_0 = arith.constant 0 : i32
    %c0_i32_1 = arith.constant 0 : i32
    return %c0_i32, %c0_i32_0 : i32, i32
  }
  func.func @transform_2(%arg0: i32) -> (i32, i32) {
    %c0_i32 = arith.constant 0 : i32
    %c0_i32_0 = arith.constant 0 : i32
    %c0_i32_1 = arith.constant 0 : i32
    return %c0_i32, %c0_i32_0 : i32, i32
  }
  func.func @transform_3(%arg0: i32) -> (i32, i32) {
    %c0_i32 = arith.constant 0 : i32
    %c0_i32_0 = arith.constant 0 : i32
    return %arg0, %c0_i32 : i32, i32
  }
}

</mosaic_0001>

<llo_original>
// kernel: tpu_custom_call.1
$region0: #{tpu_custom_call.1}
  #allocation0 [shape = 'u32[]', space=smem, size = 0x4, offset = 0x4, fixed_abs, tag = 'smem constant byte address 0x4 - core index']
  #allocation1 [shape = 'u32[72,128]{1,0:T(1,128)}', space=vmem, size = 0x9000, scoped, tag = 'internal scratch']
  %s0 = inlined_call_operand.hbm [shape: f32[2,768], index: 0, kind: input, shape index: {}]
  %s1 = inlined_call_operand.hbm [shape: f32[768,128], index: 1, kind: input, shape index: {}]
  %s2 = inlined_call_operand.vmem [shape: f32[1,128], index: 2, kind: input, shape index: {}]
  %s3 = inlined_call_operand.hbm [shape: f32[2,128], index: 3, kind: output, shape index: {}]
  %s4 = sld [smem:[#allocation0]]
  $region30: #{tpu_custom_call.1} parent=0
    _
  %s6 = ssub.s32 1, %s4
  %s7 = scalar_select 0, %s6, %s4
  $region1: #{tpu_custom_call.1} parent=0
    #allocation2 [shape = 'u8[6144]{0}', space=vmem, size = 0x1800, scoped, tag = 'input window, operand 0, single buffered']
    #allocation3 [shape = 's32[1]{0}', space=sflag, size = 0x4, scoped, tag = 'scoped memory for tpu_custom_call.1']
    #allocation4 [shape = 's32[1]{0}', space=sflag, size = 0x4, scoped, tag = 'scoped memory for tpu_custom_call.1']
    #allocation5 [shape = 'u8[393216]{0}', space=vmem, size = 0x60000, scoped, tag = 'input window, operand 1, single buffered']
    #allocation6 [shape = 's32[1]{0}', space=sflag, size = 0x4, scoped, tag = 'scoped memory for tpu_custom_call.1']
    #allocation7 [shape = 'u8[1024]{0}', space=vmem, size = 0x400, scoped, tag = 'output window, operand 0, single buffered']
    %8 = vsyncpa [#allocation3], 0
    %9 = vsyncpa [#allocation6], 0
    %10 = vsyncpa [#allocation4], 0
    // Predicated region
    $region2: #{tpu_custom_call.1} parent=1 // pred_check
      _
    $region3: #{tpu_custom_call.1} parent=1 // pred_check_branch
      %12 = sbr.rel (0) target = $region5
    $region4: #{tpu_custom_call.1} parent=1 // pred_region
      %14 = vsyncadd [#allocation3], 0
      %s16 = sshll.u32 %s0, 4
      %s17 = int_to_ptr.hbm [resolvable:$true] %s16
      %s18 = sshll.u32 [#allocation2], 4
      %s19 = int_to_ptr.vmem [resolvable:$true] %s18
      %21 = dma.hbm_to_vmem [thread:$0]  %s17, 192, %s19, [#allocation3]
    $region5: #{tpu_custom_call.1} parent=1 // pred_fallthru
      _
    // Predicated region
    $region6: #{tpu_custom_call.1} parent=1 // pred_check
      _
    $region7: #{tpu_custom_call.1} parent=1 // pred_check_branch
      %23 = sbr.rel (0) target = $region9
    $region8: #{tpu_custom_call.1} parent=1 // pred_region
      %25 = vsyncadd [#allocation6], 0
      %s26 = sshll.u32 %s1, 4
      %s27 = int_to_ptr.hbm [resolvable:$true] %s26
      %s28 = sshll.u32 [#allocation5], 4
      %s29 = int_to_ptr.vmem [resolvable:$true] %s28
      %34 = dma.hbm_to_vmem [thread:$0]  %s27, 12288, %s29, [#allocation6], 128, 128, 8
    $region9: #{tpu_custom_call.1} parent=1 // pred_fallthru
      _
    // Predicated region
    $region10: #{tpu_custom_call.1} parent=1 // pred_check
      _
    $region11: #{tpu_custom_call.1} parent=1 // pred_check_branch
      %36 = sbr.rel (0) target = $region13
    $region12: #{tpu_custom_call.1} parent=1 // pred_region
      _
    $region13: #{tpu_custom_call.1} parent=1 // pred_fallthru
      _
    // Predicated region
    $region14: #{tpu_custom_call.1} parent=1 // pred_check
      _
    $region15: #{tpu_custom_call.1} parent=1 // pred_check_branch
      %38 = sbr.rel (0) target = $region17
    $region16: #{tpu_custom_call.1} parent=1 // pred_region
      %40 = dma.done [#allocation3], 192
    $region17: #{tpu_custom_call.1} parent=1 // pred_fallthru
      _
    // Predicated region
    $region18: #{tpu_custom_call.1} parent=1 // pred_check
      _
    $region19: #{tpu_custom_call.1} parent=1 // pred_check_branch
      %42 = sbr.rel (0) target = $region21
    $region20: #{tpu_custom_call.1} parent=1 // pred_region
      %44 = dma.done [#allocation6], 12288
    $region21: #{tpu_custom_call.1} parent=1 // pred_fallthru
      _
    %v45 = vld [vmem:[#allocation2] sm:$0xff]
    %v46 = vld [vmem:[#allocation2 + $0x8] sm:$0xf]
    %v47 = vld [vmem:[#allocation5] sm:$0xff]
    %v48 = vld [vmem:[#allocation5 + $0x8] sm:$0xff]
    %v49 = vld [vmem:[#allocation5 + $0x10] sm:$0xff]
    %v50 = vld [vmem:[#allocation5 + $0x18] sm:$0xff]
    %v51 = vld [vmem:[#allocation5 + $0x20] sm:$0xff]
    %v52 = vld [vmem:[#allocation5 + $0x28] sm:$0xff]
    %v53 = vld [vmem:[#allocation5 + $0x30] sm:$0xff]
    %v54 = vld [vmem:[#allocation5 + $0x38] sm:$0xff]
    %v55 = vld [vmem:[#allocation5 + $0x40] sm:$0xff]
    %v56 = vld [vmem:[#allocation5 + $0x48] sm:$0xff]
    %v57 = vld [vmem:[#allocation5 + $0x50] sm:$0xff]
    %v58 = vld [vmem:[#allocation5 + $0x58] sm:$0xff]
    %v59 = vld [vmem:[#allocation5 + $0x60] sm:$0xff]
    %v60 = vld [vmem:[#allocation5 + $0x68] sm:$0xff]
    %v61 = vld [vmem:[#allocation5 + $0x70] sm:$0xff]
    %v62 = vld [vmem:[#allocation5 + $0x78] sm:$0xff]
    %v63 = vld [vmem:[#allocation5 + $0x80] sm:$0xff]
    %v64 = vld [vmem:[#allocation5 + $0x88] sm:$0xff]
    %v65 = vld [vmem:[#allocation5 + $0x90] sm:$0xff]
    %v66 = vld [vmem:[#allocation5 + $0x98] sm:$0xff]
    %v67 = vld [vmem:[#allocation5 + $0xa0] sm:$0xff]
    %v68 = vld [vmem:[#allocation5 + $0xa8] sm:$0xff]
    %v69 = vld [vmem:[#allocation5 + $0xb0] sm:$0xff]
    %v70 = vld [vmem:[#allocation5 + $0xb8] sm:$0xff]
    %v71 = vld [vmem:[#allocation5 + $0xc0] sm:$0xff]
    %v72 = vld [vmem:[#allocation5 + $0xc8] sm:$0xff]
    %v73 = vld [vmem:[#allocation5 + $0xd0] sm:$0xff]
    %v74 = vld [vmem:[#allocation5 + $0xd8] sm:$0xff]
    %v75 = vld [vmem:[#allocation5 + $0xe0] sm:$0xff]
    %v76 = vld [vmem:[#allocation5 + $0xe8] sm:$0xff]
    %v77 = vld [vmem:[#allocation5 + $0xf0] sm:$0xff]
    %v78 = vld [vmem:[#allocation5 + $0xf8] sm:$0xff]
    %v79 = vld [vmem:[#allocation5 + $0x100] sm:$0xff]
    %v80 = vld [vmem:[#allocation5 + $0x108] sm:$0xff]
    %v81 = vld [vmem:[#allocation5 + $0x110] sm:$0xff]
    %v82 = vld [vmem:[#allocation5 + $0x118] sm:$0xff]
    %v83 = vld [vmem:[#allocation5 + $0x120] sm:$0xff]
    %v84 = vld [vmem:[#allocation5 + $0x128] sm:$0xff]
    %v85 = vld [vmem:[#allocation5 + $0x130] sm:$0xff]
    %v86 = vld [vmem:[#allocation5 + $0x138] sm:$0xff]
    %v87 = vld [vmem:[#allocation5 + $0x140] sm:$0xff]
    %v88 = vld [vmem:[#allocation5 + $0x148] sm:$0xff]
    %v89 = vld [vmem:[#allocation5 + $0x150] sm:$0xff]
    %v90 = vld [vmem:[#allocation5 + $0x158] sm:$0xff]
    %v91 = vld [vmem:[#allocation5 + $0x160] sm:$0xff]
    %v92 = vld [vmem:[#allocation5 + $0x168] sm:$0xff]
    %v93 = vld [vmem:[#allocation5 + $0x170] sm:$0xff]
    %v94 = vld [vmem:[#allocation5 + $0x178] sm:$0xff]
    %v95 = vld [vmem:[#allocation5 + $0x180] sm:$0xff]
    %v96 = vld [vmem:[#allocation5 + $0x188] sm:$0xff]
    %v97 = vld [vmem:[#allocation5 + $0x190] sm:$0xff]
    %v98 = vld [vmem:[#allocation5 + $0x198] sm:$0xff]
    %v99 = vld [vmem:[#allocation5 + $0x1a0] sm:$0xff]
    %v100 = vld [vmem:[#allocation5 + $0x1a8] sm:$0xff]
    %v101 = vld [vmem:[#allocation5 + $0x1b0] sm:$0xff]
    %v102 = vld [vmem:[#allocation5 + $0x1b8] sm:$0xff]
    %v103 = vld [vmem:[#allocation5 + $0x1c0] sm:$0xff]
    %v104 = vld [vmem:[#allocation5 + $0x1c8] sm:$0xff]
    %v105 = vld [vmem:[#allocation5 + $0x1d0] sm:$0xff]
    %v106 = vld [vmem:[#allocation5 + $0x1d8] sm:$0xff]
    %v107 = vld [vmem:[#allocation5 + $0x1e0] sm:$0xff]
    %v108 = vld [vmem:[#allocation5 + $0x1e8] sm:$0xff]
    %v109 = vld [vmem:[#allocation5 + $0x1f0] sm:$0xff]
    %v110 = vld [vmem:[#allocation5 + $0x1f8] sm:$0xff]
    %v111 = vld [vmem:[#allocation5 + $0x200] sm:$0xff]
    %v112 = vld [vmem:[#allocation5 + $0x208] sm:$0xff]
    %v113 = vld [vmem:[#allocation5 + $0x210] sm:$0xff]
    %v114 = vld [vmem:[#allocation5 + $0x218] sm:$0xff]
    %v115 = vld [vmem:[#allocation5 + $0x220] sm:$0xff]
    %v116 = vld [vmem:[#allocation5 + $0x228] sm:$0xff]
    %v117 = vld [vmem:[#allocation5 + $0x230] sm:$0xff]
    %v118 = vld [vmem:[#allocation5 + $0x238] sm:$0xff]
    %v119 = vld [vmem:[#allocation5 + $0x240] sm:$0xff]
    %v120 = vld [vmem:[#allocation5 + $0x248] sm:$0xff]
    %v121 = vld [vmem:[#allocation5 + $0x250] sm:$0xff]
    %v122 = vld [vmem:[#allocation5 + $0x258] sm:$0xff]
    %v123 = vld [vmem:[#allocation5 + $0x260] sm:$0xff]
    %v124 = vld [vmem:[#allocation5 + $0x268] sm:$0xff]
    %v125 = vld [vmem:[#allocation5 + $0x270] sm:$0xff]
    %v126 = vld [vmem:[#allocation5 + $0x278] sm:$0xff]
    %v127 = vld [vmem:[#allocation5 + $0x280] sm:$0xff]
    %v128 = vld [vmem:[#allocation5 + $0x288] sm:$0xff]
    %v129 = vld [vmem:[#allocation5 + $0x290] sm:$0xff]
    %v130 = vld [vmem:[#allocation5 + $0x298] sm:$0xff]
    %v131 = vld [vmem:[#allocation5 + $0x2a0] sm:$0xff]
    %v132 = vld [vmem:[#allocation5 + $0x2a8] sm:$0xff]
    %v133 = vld [vmem:[#allocation5 + $0x2b0] sm:$0xff]
    %v134 = vld [vmem:[#allocation5 + $0x2b8] sm:$0xff]
    %v135 = vld [vmem:[#allocation5 + $0x2c0] sm:$0xff]
    %v136 = vld [vmem:[#allocation5 + $0x2c8] sm:$0xff]
    %v137 = vld [vmem:[#allocation5 + $0x2d0] sm:$0xff]
    %v138 = vld [vmem:[#allocation5 + $0x2d8] sm:$0xff]
    %v139 = vld [vmem:[#allocation5 + $0x2e0] sm:$0xff]
    %v140 = vld [vmem:[#allocation5 + $0x2e8] sm:$0xff]
    %v141 = vld [vmem:[#allocation5 + $0x2f0] sm:$0xff]
    %v142 = vld [vmem:[#allocation5 + $0x2f8] sm:$0xff]
    %v143 = vld [vmem:[%s2] sm:$0x1]
    %v145 = vperm.slane %v143, 0
    %149 = vst [vmem:[#allocation1] ss:$4 sm:$0xff] %v45
    %s150 = scalar_lea.vmem [#allocation1], 32
    %151 = vst [vmem:[%s150] ss:$4 sm:$0xff] %v46
    %v152 = vld.sshfl [vmem:[#allocation1] sm:$0xff pattern:$0x73625140]
    %v153 = vld.sshfl [vmem:[#allocation1 + $0x8] sm:$0xff pattern:$0x73625140]
    %v154 = vld.sshfl [vmem:[#allocation1 + $0x10] sm:$0xff pattern:$0x73625140]
    %v155 = vld.sshfl [vmem:[#allocation1 + $0x18] sm:$0xff pattern:$0x73625140]
    %v156 = vld.sshfl [vmem:[#allocation1 + $0x20] sm:$0xff pattern:$0x73625140]
    %v157 = vld.sshfl [vmem:[#allocation1 + $0x28] sm:$0xff pattern:$0x73625140]
    %164 = vmatpush.msra.mxu0 %v62
    %165 = vmatpush.msra.mxu0 %v61
    %166 = vmatpush.msra.mxu0 %v60
    %167 = vmatpush.msra.mxu0 %v59
    %168 = vmatpush.msra.mxu0 %v58
    %169 = vmatpush.msra.mxu0 %v57
    %170 = vmatpush.msra.mxu0 %v56
    %171 = vmatpush.msra.mxu0 %v55
    %172 = vmatpush.msra.mxu0 %v54
    %173 = vmatpush.msra.mxu0 %v53
    %174 = vmatpush.msra.mxu0 %v52
    %175 = vmatpush.msra.mxu0 %v51
    %176 = vmatpush.msra.mxu0 %v50
    %177 = vmatpush.msra.mxu0 %v49
    %178 = vmatpush.msra.mxu0 %v48
    %179 = vmatpush.msra.mxu0 %v47
    %180 = vmatmul.f32.gmra.mxu0 %v152
    %v181 = vpop.f32.mrf.mxu0
    %v182 = vadd.f32 %v145, %v181
    %183 = vdwg.mxu0
    %184 = vmatpush.msra.mxu0 %v78
    %185 = vmatpush.msra.mxu0 %v77
    %186 = vmatpush.msra.mxu0 %v76
    %187 = vmatpush.msra.mxu0 %v75
    %188 = vmatpush.msra.mxu0 %v74
    %189 = vmatpush.msra.mxu0 %v73
    %190 = vmatpush.msra.mxu0 %v72
    %191 = vmatpush.msra.mxu0 %v71
    %192 = vmatpush.msra.mxu0 %v70
    %193 = vmatpush.msra.mxu0 %v69
    %194 = vmatpush.msra.mxu0 %v68
    %195 = vmatpush.msra.mxu0 %v67
    %196 = vmatpush.msra.mxu0 %v66
    %197 = vmatpush.msra.mxu0 %v65
    %198 = vmatpush.msra.mxu0 %v64
    %199 = vmatpush.msra.mxu0 %v63
    %200 = vmatmul.f32.gmra.mxu0 %v153
    %v201 = vpop.f32.mrf.mxu0
    %v202 = vadd.f32 %v182, %v201
    %203 = vdwg.mxu0
    %204 = vmatpush.msra.mxu0 %v94
    %205 = vmatpush.msra.mxu0 %v93
    %206 = vmatpush.msra.mxu0 %v92
    %207 = vmatpush.msra.mxu0 %v91
    %208 = vmatpush.msra.mxu0 %v90
    %209 = vmatpush.msra.mxu0 %v89
    %210 = vmatpush.msra.mxu0 %v88
    %211 = vmatpush.msra.mxu0 %v87
    %212 = vmatpush.msra.mxu0 %v86
    %213 = vmatpush.msra.mxu0 %v85
    %214 = vmatpush.msra.mxu0 %v84
    %215 = vmatpush.msra.mxu0 %v83
    %216 = vmatpush.msra.mxu0 %v82
    %217 = vmatpush.msra.mxu0 %v81
    %218 = vmatpush.msra.mxu0 %v80
    %219 = vmatpush.msra.mxu0 %v79
    %220 = vmatmul.f32.gmra.mxu0 %v154
    %v221 = vpop.f32.mrf.mxu0
    %v222 = vadd.f32 %v202, %v221
    %223 = vdwg.mxu0
    %224 = vmatpush.msra.mxu0 %v110
    %225 = vmatpush.msra.mxu0 %v109
    %226 = vmatpush.msra.mxu0 %v108
    %227 = vmatpush.msra.mxu0 %v107
    %228 = vmatpush.msra.mxu0 %v106
    %229 = vmatpush.msra.mxu0 %v105
    %230 = vmatpush.msra.mxu0 %v104
    %231 = vmatpush.msra.mxu0 %v103
    %232 = vmatpush.msra.mxu0 %v102
    %233 = vmatpush.msra.mxu0 %v101
    %234 = vmatpush.msra.mxu0 %v100
    %235 = vmatpush.msra.mxu0 %v99
    %236 = vmatpush.msra.mxu0 %v98
    %237 = vmatpush.msra.mxu0 %v97
    %238 = vmatpush.msra.mxu0 %v96
    %239 = vmatpush.msra.mxu0 %v95
    %240 = vmatmul.f32.gmra.mxu0 %v155
    %v241 = vpop.f32.mrf.mxu0
    %v242 = vadd.f32 %v222, %v241
    %243 = vdwg.mxu0
    %244 = vmatpush.msra.mxu0 %v126
    %245 = vmatpush.msra.mxu0 %v125
    %246 = vmatpush.msra.mxu0 %v124
    %247 = vmatpush.msra.mxu0 %v123
    %248 = vmatpush.msra.mxu0 %v122
    %249 = vmatpush.msra.mxu0 %v121
    %250 = vmatpush.msra.mxu0 %v120
    %251 = vmatpush.msra.mxu0 %v119
    %252 = vmatpush.msra.mxu0 %v118
    %253 = vmatpush.msra.mxu0 %v117
    %254 = vmatpush.msra.mxu0 %v116
    %255 = vmatpush.msra.mxu0 %v115
    %256 = vmatpush.msra.mxu0 %v114
    %257 = vmatpush.msra.mxu0 %v113
    %258 = vmatpush.msra.mxu0 %v112
    %259 = vmatpush.msra.mxu0 %v111
    %260 = vmatmul.f32.gmra.mxu0 %v156
    %v261 = vpop.f32.mrf.mxu0
    %v262 = vadd.f32 %v242, %v261
    %263 = vdwg.mxu0
    %264 = vmatpush.msra.mxu0 %v142
    %265 = vmatpush.msra.mxu0 %v141
    %266 = vmatpush.msra.mxu0 %v140
    %267 = vmatpush.msra.mxu0 %v139
    %268 = vmatpush.msra.mxu0 %v138
    %269 = vmatpush.msra.mxu0 %v137
    %270 = vmatpush.msra.mxu0 %v136
    %271 = vmatpush.msra.mxu0 %v135
    %272 = vmatpush.msra.mxu0 %v134
    %273 = vmatpush.msra.mxu0 %v133
    %274 = vmatpush.msra.mxu0 %v132
    %275 = vmatpush.msra.mxu0 %v131
    %276 = vmatpush.msra.mxu0 %v130
    %277 = vmatpush.msra.mxu0 %v129
    %278 = vmatpush.msra.mxu0 %v128
    %279 = vmatpush.msra.mxu0 %v127
    %280 = vmatmul.f32.gmra.mxu0 %v157
    %v281 = vpop.f32.mrf.mxu0
    %v282 = vadd.f32 %v262, %v281
    %283 = vdwg.mxu0
    %284 = vst [vmem:[#allocation7] sm:$0x3] %v282
    // Predicated region
    $region22: #{tpu_custom_call.1} parent=1 // pred_check
      _
    $region23: #{tpu_custom_call.1} parent=1 // pred_check_branch
      %286 = sbr.rel (0) target = $region25
    $region24: #{tpu_custom_call.1} parent=1 // pred_region
      %288 = vsyncadd [#allocation4], 0
      %s290 = sshll.u32 [#allocation7], 4
      %s291 = int_to_ptr.vmem [resolvable:$true] %s290
      %s292 = sshll.u32 %s3, 4
      %s293 = int_to_ptr.hbm [resolvable:$true] %s292
      %295 = dma.vmem_to_hbm [thread:$0]  %s291, 32, %s293, [#allocation4]
    $region25: #{tpu_custom_call.1} parent=1 // pred_fallthru
      _
    // Predicated region
    $region26: #{tpu_custom_call.1} parent=1 // pred_check
      _
    $region27: #{tpu_custom_call.1} parent=1 // pred_check_branch
      %297 = sbr.rel (0) target = $region29
    $region28: #{tpu_custom_call.1} parent=1 // pred_region
      %299 = dma.done [#allocation4], 32
    $region29: #{tpu_custom_call.1} parent=1 // pred_fallthru
      _
    %300 = vsyncpa [#allocation3], 1
    %301 = vsyncpa [#allocation6], 1
    %302 = vsyncpa [#allocation4], 1

</llo_original>
